<compile_context>
chip_gen: v7x
topology: tpu7x:2x2x1
jax: 0.10.0
libtpu: 0.0.40
codegen_flags: <defaults>
</compile_context>

<pallas_src>
from functools import partial

import jax
import jax.numpy as jnp
from jax import lax
from jax.experimental import pallas as pl
from jax.experimental.pallas import tpu as pltpu


_VMEM_TILE_BUDGET = 40 * 1024 * 1024   # cap on double-buffered tile working set
_VMEM_LIMIT = 48 * 1024 * 1024         # scoped VMEM limit (safe on v5e/v6e/v7x)


def _cdiv(a, b):
    return (a + b - 1) // b


def _round_up(x, m):
    return _cdiv(x, m) * m


def _linear_block_kernel_single_k(x_ref, w_ref, b_ref, o_ref):
    """Single K tile: one MXU dot + fused bias/ReLU epilogue. No scratch."""
    y = jnp.dot(x_ref[...], w_ref[...], preferred_element_type=jnp.float32)
    o_ref[...] = jnp.maximum(y + b_ref[...], 0.0).astype(o_ref.dtype)


def _linear_block_kernel_kacc(x_ref, w_ref, b_ref, o_ref, acc_ref):
    """K-tiled variant: f32 VMEM accumulator, init at k==0, epilogue at k==last."""
    k = pl.program_id(2)

    @pl.when(k == 0)
    def _():
        acc_ref[...] = jnp.zeros_like(acc_ref)

    acc_ref[...] += jnp.dot(x_ref[...], w_ref[...],
                            preferred_element_type=jnp.float32)

    @pl.when(k == pl.num_programs(2) - 1)
    def _():
        o_ref[...] = jnp.maximum(acc_ref[...] + b_ref[...], 0.0).astype(o_ref.dtype)


@partial(jax.jit, static_argnames=("single_k_budget",))
def linear_block(x, weight, bias, single_k_budget=_VMEM_TILE_BUDGET):
    """Pallas equivalent of LinearBlock.forward with act='relu'.

    Args:
      x:      (*, din) float32
      weight: (dout, din) float32  (PyTorch nn.Linear storage layout)
      bias:   (dout,)    float32

    Returns:
      (*, dout) float32
    """
    din = x.shape[-1]
    dout = weight.shape[0]
    lead = x.shape[:-1]

    x2d = x.reshape(-1, din)                  # (M, din)
    m = x2d.shape[0]

    # One-time layout fix: (dout, din) -> (din, dout).  Keeps the in-kernel
    # contraction a pure NN matmul (no per-tile weight transpose on the XLU).
    wt = weight.T                             # (din, dout)
    b2d = bias.reshape(1, dout)               # (1, dout)

    # ---- tile sizes (f32: sublane multiple 8, lane multiple 128) ----
    tm = min(512, _round_up(m, 8))
    tn = dout if dout <= 512 else 512         # full-dim block is always legal

    # Ensure >= 2 parallel blocks when possible so both v7x TensorCores work.
    if _cdiv(m, tm) * _cdiv(dout, tn) < 2 and m >= 256:
        tm = _round_up(_cdiv(m, 2), 8)

    nm = _cdiv(m, tm)
    nn = _cdiv(dout, tn)

    itemsize = x2d.dtype.itemsize
    cost = pl.CostEstimate(
        flops=2 * m * din * dout,
        transcendentals=0,
        bytes_accessed=itemsize * (m * din + din * dout + dout + m * dout))

    # Double-buffered x-tile + w-tile + bias + out-tile working set if K is a
    # single tile of exactly `din`.
    single_k_bytes = 2 * itemsize * (tm * din + din * tn + tn + tm * tn)

    if single_k_bytes <= single_k_budget:
        # ---- fast path: 2-D grid, tk == din, zero padding anywhere ----
        out = pl.pallas_call(
            _linear_block_kernel_single_k,
            out_shape=jax.ShapeDtypeStruct((m, dout), x.dtype),
            grid_spec=pltpu.PrefetchScalarGridSpec(
                num_scalar_prefetch=0,
                grid=(nm, nn),
                in_specs=[
                    pl.BlockSpec((tm, din), lambda i, j: (i, 0)),   # x tile
                    pl.BlockSpec((din, tn), lambda i, j: (0, j)),   # w.T tile
                    pl.BlockSpec((1, tn), lambda i, j: (0, j)),     # bias tile
                ],
                out_specs=pl.BlockSpec((tm, tn), lambda i, j: (i, j)),
            ),
            compiler_params=pltpu.CompilerParams(
                dimension_semantics=("parallel", "parallel"),
                vmem_limit_bytes=_VMEM_LIMIT),
            cost_estimate=cost,
        )(x2d, wt, b2d)
    else:
        # ---- K-tiled path: tk is the 128-multiple that near-divides din ----
        tk_cap = 2048
        nk = _cdiv(din, tk_cap)
        tk = _round_up(_cdiv(din, nk), 128)
        kp = nk * tk
        if kp != din:
            # K MUST be zero-padded exactly: overhang garbage in x/w would
            # otherwise contaminate real output elements.
            x2d = jnp.pad(x2d, ((0, 0), (0, kp - din)))
            wt = jnp.pad(wt, ((0, kp - din), (0, 0)))

        out = pl.pallas_call(
            _linear_block_kernel_kacc,
            out_shape=jax.ShapeDtypeStruct((m, dout), x.dtype),
            grid_spec=pltpu.PrefetchScalarGridSpec(
                num_scalar_prefetch=0,
                grid=(nm, nn, nk),
                in_specs=[
                    pl.BlockSpec((tm, tk), lambda i, j, k: (i, k)),
                    pl.BlockSpec((tk, tn), lambda i, j, k: (k, j)),
                    pl.BlockSpec((1, tn), lambda i, j, k: (0, j)),
                ],
                out_specs=pl.BlockSpec((tm, tn), lambda i, j, k: (i, j)),
                scratch_shapes=[pltpu.VMEM((tm, tn), jnp.float32)],
            ),
            compiler_params=pltpu.CompilerParams(
                dimension_semantics=("parallel", "parallel", "arbitrary"),
                vmem_limit_bytes=_VMEM_LIMIT),
            cost_estimate=cost,
        )(x2d, wt, b2d)

    return out.reshape(*lead, dout)


def _reference(x, weight, bias):
    y = jnp.einsum("...i,oi->...o", x, weight, precision=lax.Precision.HIGHEST)
    return jnp.maximum(y + bias, 0.0)


def _make_inputs(key, lead, din, dout, lim=2.0):
    kx, kw, kb = jax.random.split(key, 3)
    x = jax.random.normal(kx, (*lead, din), dtype=jnp.float32)
    # nn.init.uniform_(weight, -lim, lim)
    weight = jax.random.uniform(kw, (dout, din), dtype=jnp.float32,
                                minval=-lim, maxval=lim)
    # PyTorch default bias init: U(-1/sqrt(din), 1/sqrt(din))
    bound = 1.0 / jnp.sqrt(jnp.float32(din))
    bias = jax.random.uniform(kb, (dout,), dtype=jnp.float32,
                              minval=-bound, maxval=bound)
    return x, weight, bias


if __name__ == "__main__":
    key = jax.random.PRNGKey(0)
    k1, k2, k3 = jax.random.split(key, 3)

    # Small module-like shape: (batch=2, seq=8, din=32) -> dout=64.
    # Exercises the single-K path with full-dim (sub-128) N blocks.
    x, w, b = _make_inputs(k1, (2, 8), din=32, dout=64)
    y = linear_block(x, w, b)
    jax.block_until_ready(y)
    assert y.shape == (2, 8, 64)
    assert jnp.allclose(y, _reference(x, w, b), atol=1e-4, rtol=1e-4)

    # Medium shape with non-128-multiple din: single-K path, tk = din = 640,
    # M split across two parallel blocks, no padding anywhere.
    x2, w2, b2 = _make_inputs(k2, (4, 128), din=640, dout=256)
    y2 = linear_block(x2, w2, b2)
    jax.block_until_ready(y2)
    assert y2.shape == (4, 128, 256)
    assert jnp.allclose(y2, _reference(x2, w2, b2), atol=1e-3, rtol=1e-3)

    # Force the K-tiled accumulator path (tiny budget) to validate it:
    # din=2176 -> nk=2, tk=1152, K zero-padded to 2304.
    x3, w3, b3 = _make_inputs(k3, (2, 4), din=2176, dout=128)
    y3 = linear_block(x3, w3, b3, single_k_budget=0)
    jax.block_until_ready(y3)
    assert y3.shape == (2, 4, 128)
    assert jnp.allclose(y3, _reference(x3, w3, b3), atol=5e-3, rtol=1e-3)

    print("KERNEL_OK")
</pallas_src>

<mosaic_0001>
module attributes {stable_mosaic.version = 11 : i64} {
  func.func @_linear_block_kernel_single_k(%arg0: i32, %arg1: i32, %arg2: memref<16x32xf32, #tpu.memory_space<vmem>>, %arg3: memref<32x64xf32, #tpu.memory_space<vmem>>, %arg4: memref<1x64xf32, #tpu.memory_space<vmem>>, %arg5: memref<16x64xf32, #tpu.memory_space<vmem>>) attributes {dimension_semantics = [#tpu.dimension_semantics<parallel>, #tpu.dimension_semantics<parallel>], iteration_bounds = array<i64: 1, 1>, scalar_prefetch = 0 : i64, scratch_operands = 0 : i64, tpu.core_type = #tpu.core_type<tc>, window_params = [{transform_indices = @transform_0, window_bounds = array<i64: 16, 32>}, {transform_indices = @transform_1, window_bounds = array<i64: 32, 64>}, {transform_indices = @transform_2, window_bounds = array<i64: 1, 64>}, {transform_indices = @transform_3, window_bounds = array<i64: 16, 64>}]} {
    %c0 = arith.constant 0 : index
    %c0_0 = arith.constant 0 : index
    %0 = vector.load %arg2[%c0, %c0_0] : memref<16x32xf32, #tpu.memory_space<vmem>>, vector<16x32xf32>
    %c0_1 = arith.constant 0 : index
    %c0_2 = arith.constant 0 : index
    %1 = vector.load %arg3[%c0_1, %c0_2] : memref<32x64xf32, #tpu.memory_space<vmem>>, vector<32x64xf32>
    %cst = arith.constant dense<0.000000e+00> : vector<16x64xf32>
    %2 = tpu.matmul %0, %1, %cst {dimension_numbers = #tpu.dot_dimension_numbers<[1], [0], [0], [1], [0, 0, 1, 1], [], []>} : vector<16x32xf32>, vector<32x64xf32>, vector<16x64xf32> -> vector<16x64xf32>
    %c0_3 = arith.constant 0 : index
    %c0_4 = arith.constant 0 : index
    %3 = vector.load %arg4[%c0_3, %c0_4] : memref<1x64xf32, #tpu.memory_space<vmem>>, vector<1x64xf32>
    %4 = vector.broadcast %3 : vector<1x64xf32> to vector<16x64xf32>
    %5 = arith.addf %2, %4 : vector<16x64xf32>
    %cst_5 = arith.constant 0.000000e+00 : f32
    %6 = vector.broadcast %cst_5 : f32 to vector<16x64xf32>
    %7 = arith.maximumf %5, %6 : vector<16x64xf32>
    %c0_6 = arith.constant 0 : index
    %c0_7 = arith.constant 0 : index
    %8 = vector.load %arg5[%c0_6, %c0_7] : memref<16x64xf32, #tpu.memory_space<vmem>>, vector<16x64xf32>
    tpu.vector_store %arg5[%c0_6, %c0_7], %7 {strides = array<i32>} : memref<16x64xf32, #tpu.memory_space<vmem>>, vector<16x64xf32>,
    return
  }
  func.func @transform_0(%arg0: i32, %arg1: i32) -> (i32, i32) {
    %c0_i32 = arith.constant 0 : i32
    %c0_i32_0 = arith.constant 0 : i32
    return %arg0, %c0_i32 : i32, i32
  }
  func.func @transform_1(%arg0: i32, %arg1: i32) -> (i32, i32) {
    %c0_i32 = arith.constant 0 : i32
    %c0_i32_0 = arith.constant 0 : i32
    return %c0_i32, %arg1 : i32, i32
  }
  func.func @transform_2(%arg0: i32, %arg1: i32) -> (i32, i32) {
    %c0_i32 = arith.constant 0 : i32
    %c0_i32_0 = arith.constant 0 : i32
    return %c0_i32, %arg1 : i32, i32
  }
  func.func @transform_3(%arg0: i32, %arg1: i32) -> (i32, i32) {
    %c0_i32 = arith.constant 0 : i32
    return %arg0, %arg1 : i32, i32
  }
}

</mosaic_0001>

<llo_original>
// kernel: linear_block.1
$region0: #{linear_block.1}
  #allocation0 [shape = 'u32[]', space=smem, size = 0x4, offset = 0x4, fixed_abs, tag = 'smem constant byte address 0x4 - core index']
  #allocation1 [shape = 'u32[144,128]{1,0:T(1,128)}', space=vmem, size = 0x12000, scoped, tag = 'internal scratch']
  %s0 = inlined_call_operand.hbm [shape: f32[16,32], index: 0, kind: input, shape index: {}]
  %s1 = inlined_call_operand.hbm [shape: f32[32,64], index: 1, kind: input, shape index: {}]
  %s2 = inlined_call_operand.vmem [shape: f32[1,64], index: 2, kind: input, shape index: {}]
  %s3 = inlined_call_operand.hbm [shape: f32[16,64], index: 3, kind: output, shape index: {}]
  %s4 = sld [smem:[#allocation0]]
  $region30: #{linear_block.1} parent=0
    _
  %s6 = ssub.s32 1, %s4
  %s7 = scalar_select 0, %s6, %s4
  $region1: #{linear_block.1} parent=0
    #allocation2 [shape = 'u8[8192]{0}', space=vmem, size = 0x2000, scoped, tag = 'input window, operand 0, single buffered']
    #allocation3 [shape = 's32[1]{0}', space=sflag, size = 0x4, scoped, tag = 'scoped memory for linear_block.1']
    #allocation4 [shape = 's32[1]{0}', space=sflag, size = 0x4, scoped, tag = 'scoped memory for linear_block.1']
    #allocation5 [shape = 'u8[16384]{0}', space=vmem, size = 0x4000, scoped, tag = 'input window, operand 1, single buffered']
    #allocation6 [shape = 's32[1]{0}', space=sflag, size = 0x4, scoped, tag = 'scoped memory for linear_block.1']
    #allocation7 [shape = 'u8[8192]{0}', space=vmem, size = 0x2000, scoped, tag = 'output window, operand 0, single buffered']
    %8 = vsyncpa [#allocation3], 0
    %9 = vsyncpa [#allocation6], 0
    %10 = vsyncpa [#allocation4], 0
    // Predicated region
    $region2: #{linear_block.1} parent=1 // pred_check
      _
    $region3: #{linear_block.1} parent=1 // pred_check_branch
      %12 = sbr.rel (0) target = $region5
    $region4: #{linear_block.1} parent=1 // pred_region
      %s14 = ssub.s32 256, 256
      %15 = vsyncadd [#allocation3], %s14
      %s16 = sshll.u32 [#allocation2], 4
      %s17 = int_to_ptr.vmem [resolvable:$true] %s16
      %22 = dma.hbm_to_vmem [thread:$0]  %s0, 256, %s17, [#allocation3], 128, 128, 8
    $region5: #{linear_block.1} parent=1 // pred_fallthru
      _
    // Predicated region
    $region6: #{linear_block.1} parent=1 // pred_check
      _
    $region7: #{linear_block.1} parent=1 // pred_check_branch
      %24 = sbr.rel (0) target = $region9
    $region8: #{linear_block.1} parent=1 // pred_region
      %s26 = ssub.s32 512, 512
      %27 = vsyncadd [#allocation6], %s26
      %s28 = sshll.u32 [#allocation5], 4
      %s29 = int_to_ptr.vmem [resolvable:$true] %s28
      %34 = dma.hbm_to_vmem [thread:$0]  %s1, 512, %s29, [#allocation6], 128, 128, 8
    $region9: #{linear_block.1} parent=1 // pred_fallthru
      _
    // Predicated region
    $region10: #{linear_block.1} parent=1 // pred_check
      _
    $region11: #{linear_block.1} parent=1 // pred_check_branch
      %36 = sbr.rel (0) target = $region13
    $region12: #{linear_block.1} parent=1 // pred_region
      _
    $region13: #{linear_block.1} parent=1 // pred_fallthru
      _
    // Predicated region
    $region14: #{linear_block.1} parent=1 // pred_check
      _
    $region15: #{linear_block.1} parent=1 // pred_check_branch
      %38 = sbr.rel (0) target = $region17
    $region16: #{linear_block.1} parent=1 // pred_region
      %39 = dma.done [#allocation3], 256
    $region17: #{linear_block.1} parent=1 // pred_fallthru
      _
    // Predicated region
    $region18: #{linear_block.1} parent=1 // pred_check
      _
    $region19: #{linear_block.1} parent=1 // pred_check_branch
      %41 = sbr.rel (0) target = $region21
    $region20: #{linear_block.1} parent=1 // pred_region
      %42 = dma.done [#allocation6], 512
    $region21: #{linear_block.1} parent=1 // pred_fallthru
      _
    %v43 = vld [vmem:[#allocation2] sm:$0xff]
    %v44 = vld [vmem:[#allocation2 + $0x8] sm:$0xff]
    %v45 = vld [vmem:[#allocation5] sm:$0xff]
    %v46 = vld [vmem:[#allocation5 + $0x8] sm:$0xff]
    %v47 = vld [vmem:[#allocation5 + $0x10] sm:$0xff]
    %v48 = vld [vmem:[#allocation5 + $0x18] sm:$0xff]
    %v49 = vld [vmem:[%s2] sm:$0x1]
    %v51 = vlaneseq
    %v52 = vshrl.u32 %v51, 7
    %v53 = vsub.s32 0, %v52
    %v54 = vrot.slane %v49, %v53
    %vm56 = vcmask 261120
    %v58 = vsel %vm56, %v43, 0
    %v61 = vsel %vm56, %v44, 0
    %63 = vmatprep.subr.mxu0 0.0
    %64 = vmatpush1.msra.mxu0 %v45
    %65 = vmatprep.subr.mxu0 0.0
    %66 = vmatpush1.msra.mxu0 %v46
    %67 = vmatprep.subr.mxu0 0.0
    %68 = vmatpush1.msra.mxu0 %v47
    %69 = vmatprep.subr.mxu0 0.0
    %70 = vmatpush1.msra.mxu0 %v48
    %71 = vmatprep.subr.mxu0 0.0
    %72 = vmatpush1.msra.mxu0 0.0
    %73 = vmatprep.subr.mxu0 0.0
    %74 = vmatpush1.msra.mxu0 0.0
    %75 = vmatprep.subr.mxu0 0.0
    %76 = vmatpush1.msra.mxu0 0.0
    %77 = vmatprep.subr.mxu0 0.0
    %78 = vmatpush1.msra.mxu0 0.0
    %79 = vmatprep.subr.mxu0 0.0
    %80 = vmatpush1.msra.mxu0 0.0
    %81 = vmatprep.subr.mxu0 0.0
    %82 = vmatpush1.msra.mxu0 0.0
    %83 = vmatprep.subr.mxu0 0.0
    %84 = vmatpush1.msra.mxu0 0.0
    %85 = vmatprep.subr.mxu0 0.0
    %86 = vmatpush1.msra.mxu0 0.0
    %87 = vmatprep.subr.mxu0 0.0
    %88 = vmatpush1.msra.mxu0 0.0
    %89 = vmatprep.subr.mxu0 0.0
    %90 = vmatpush1.msra.mxu0 0.0
    %91 = vmatprep.subr.mxu0 0.0
    %92 = vmatpush1.msra.mxu0 0.0
    %93 = vmatprep.subr.mxu0 0.0
    %94 = vmatpush1.msra.mxu0 0.0
    %95 = vmatprep.subr.mxu0 0.0
    %96 = vmatpush1.msra.mxu0 0.0
    %97 = vmatprep.subr.mxu0 0.0
    %98 = vmatpush1.msra.mxu0 0.0
    %99 = vmatprep.subr.mxu0 0.0
    %100 = vmatpush1.msra.mxu0 0.0
    %101 = vmatprep.subr.mxu0 0.0
    %102 = vmatpush1.msra.mxu0 0.0
    %103 = vmatprep.subr.mxu0 0.0
    %104 = vmatpush1.msra.mxu0 0.0
    %105 = vmatprep.subr.mxu0 0.0
    %106 = vmatpush1.msra.mxu0 0.0
    %107 = vmatprep.subr.mxu0 0.0
    %108 = vmatpush1.msra.mxu0 0.0
    %109 = vmatprep.subr.mxu0 0.0
    %110 = vmatpush1.msra.mxu0 0.0
    %111 = vmatprep.subr.mxu0 0.0
    %112 = vmatpush1.msra.mxu0 0.0
    %113 = vmatprep.subr.mxu0 0.0
    %114 = vmatpush1.msra.mxu0 0.0
    %115 = vmatprep.subr.mxu0 0.0
    %116 = vmatpush1.msra.mxu0 0.0
    %117 = vmatprep.subr.mxu0 0.0
    %118 = vmatpush1.msra.mxu0 0.0
    %119 = vmatprep.subr.mxu0 0.0
    %120 = vmatpush1.msra.mxu0 0.0
    %121 = vmatprep.subr.mxu0 0.0
    %122 = vmatpush1.msra.mxu0 0.0
    %123 = vmatprep.subr.mxu0 0.0
    %124 = vmatpush1.msra.mxu0 0.0
    %125 = vmatprep.subr.mxu0 0.0
    %126 = vmatpush1.msra.mxu0 0.0
    %127 = vmatprep.mubr.f32.mxu0 0.0
    %128 = vmatmul.mubr.f32.gmra.mrb[0].mxu0 %v58
    %v129 = vpop.f32.mrb[0].mxu0
    %v130 = vadd.f32 %v54, %v129
    %v131 = vpop.f32.mrb[0].mxu0
    %132 = vmatprep.mubr.f32.mxu0 0.0
    %133 = vmatmul.mubr.f32.gmra.mrb[0].mxu0 %v61
    %v134 = vpop.f32.mrb[0].mxu0
    %v135 = vadd.f32 %v54, %v134
    %v136 = vpop.f32.mrb[0].mxu0
    %137 = vdwg.mxu0
    %v138 = vmax.f32 %v130, 0.0
    %v139 = vmax.f32 %v135, 0.0
    %vm140 = vcmask 523264
    %141 = vst.msk [vmem:[#allocation7] sm:$0xff] %vm140, %v138
    %142 = vst.msk [vmem:[#allocation7 + $0x8] sm:$0xff] %vm140, %v139
    // Predicated region
    $region22: #{linear_block.1} parent=1 // pred_check
      _
    $region23: #{linear_block.1} parent=1 // pred_check_branch
      %144 = sbr.rel (0) target = $region25
    $region24: #{linear_block.1} parent=1 // pred_region
      %s146 = ssub.s32 256, 256
      %147 = vsyncadd [#allocation4], %s146
      %s148 = sshll.u32 [#allocation7], 4
      %s149 = int_to_ptr.vmem [resolvable:$true] %s148
      %154 = dma.vmem_to_hbm [thread:$0]  %s149, 256, %s3, [#allocation4], 128, 128, 8
    $region25: #{linear_block.1} parent=1 // pred_fallthru
      _
    // Predicated region
    $region26: #{linear_block.1} parent=1 // pred_check
      _
    $region27: #{linear_block.1} parent=1 // pred_check_branch
      %156 = sbr.rel (0) target = $region29
    $region28: #{linear_block.1} parent=1 // pred_region
      %157 = dma.done [#allocation4], 256
    $region29: #{linear_block.1} parent=1 // pred_fallthru
      _
    %158 = vsyncpa [#allocation3], 1
    %159 = vsyncpa [#allocation6], 1
    %160 = vsyncpa [#allocation4], 1

</llo_original>
